<compile_context>
chip_gen: v6e
topology: v6e:2x2x1
jax: 0.10.0
libtpu: 0.0.40
codegen_flags: <defaults>
</compile_context>

<pallas_src>
import jax
import jax.numpy as jnp
from jax.experimental import pallas as pl
from jax.experimental.pallas import tpu as pltpu


# --------------------------------------------------------------------------
# Kernels
# --------------------------------------------------------------------------
def _critic_head_resident_kernel(x_ref, w1_ref, b1_ref, w2_ref, b2_ref, v_ref):
    # x_ref : (TB, H)  producer dtype (bf16 expected)
    # w1_ref: (H,  H)  bf16, resident (Buffered(1), constant index map)
    # b1_ref: (1,  H)  f32
    # w2_ref: (1,  H)  f32  (H->1 projection as VPU mul + XLU lane reduce)
    # b2_ref: (1,)     f32 in SMEM
    # v_ref : (1, TB)  f32  lane-dense output row
    x = x_ref[...].astype(jnp.bfloat16)  # no-op when producer streams bf16
    h = jnp.dot(x, w1_ref[...], preferred_element_type=jnp.float32)   # MXU
    h = jnp.tanh(h + b1_ref[...])                                     # VPU/EUP
    v = jnp.sum(h * w2_ref[...], axis=-1)                             # VPU+XLU
    v_ref[...] = v.reshape(v_ref.shape) + b2_ref[0]


def _critic_head_ktiled_kernel(x_ref, w1_ref, b1_ref, w2_ref, b2_ref, v_ref,
                               acc_ref):
    # grid = (n_b, n_k); K (reduction) axis last, marked "arbitrary".
    # x_ref : (TB, TK) block (i, k);  w1_ref: (TK, H) block (k, 0)
    # acc_ref: (TB, H) f32 scratch accumulator, persists across k.
    k = pl.program_id(1)

    @pl.when(k == 0)
    def _():
        acc_ref[...] = jnp.zeros_like(acc_ref)

    x = x_ref[...].astype(jnp.bfloat16)
    acc_ref[...] += jnp.dot(x, w1_ref[...], preferred_element_type=jnp.float32)

    @pl.when(k == pl.num_programs(1) - 1)
    def _():
        h = jnp.tanh(acc_ref[...] + b1_ref[...])
        v = jnp.sum(h * w2_ref[...], axis=-1)
        v_ref[...] = v.reshape(v_ref.shape) + b2_ref[0]


# --------------------------------------------------------------------------
# Wrapper
# --------------------------------------------------------------------------
def _round_up(x, m):
    return ((x + m - 1) // m) * m


def _cdiv(a, b):
    return (a + b - 1) // b


def _vmem_budget_bytes():
    # 75% of physical VMEM per chip (~96 MiB on v5e/v6e, ~48 MiB on v7x).
    try:
        cap = int(pltpu.get_tpu_info().vmem_capacity_bytes)
    except Exception:  # non-TPU / interpret fallbacks
        cap = 128 << 20
    return (cap * 3) // 4


def critic_head_wrapper(obs, params, *, max_batch_tile=4096, k_tile=None):
    """Pallas value head: {'state_value': tanh(obs @ W1 + b1) @ W2 + b2}.

    obs:    (batch, hidden) features; stream in bf16 from the producer
            (no cast is added here -- the kernel casts in-VMEM if needed).
    params: dict from init_critic_params (kernel-native layout, casts hoisted):
            w1 (H,H) bf16, b1 (1,H) f32, w2 (1,H) f32, b2 (1,) f32.
    """
    w1, b1, w2, b2 = params["w1"], params["b1"], params["w2"], params["b2"]
    B, H = obs.shape
    assert w1.shape == (H, H) and b1.shape == (1, H)
    assert w2.shape == (1, H) and b2.shape == (1,)

    obs_bytes = obs.dtype.itemsize
    w1_bytes = w1.dtype.itemsize
    budget = _vmem_budget_bytes()

    # ---- K tiling: only stream W1 when it cannot sit resident in VMEM ----
    n_k, TK = 1, H
    if k_tile is not None:
        if 0 < k_tile < H and H % k_tile == 0 and k_tile % 128 == 0:
            TK, n_k = k_tile, H // k_tile
    elif H * H * w1_bytes > budget // 2:
        for cand in (1024, 512, 256, 128):
            if H % cand == 0:
                TK, n_k = cand, H // cand
                break
        # TODO(synk): very large H not divisible by 128 would need one-time
        # zero-padded params from init; falls back to resident W1 here.

    # ---- resident weight bytes (W1 single-buffered when resident) ---------
    if n_k == 1:
        weight_bytes = H * H * w1_bytes + 2 * 8 * _round_up(H, 128) * 4
    else:
        weight_bytes = 2 * TK * H * w1_bytes + 2 * 8 * _round_up(H, 128) * 4

    # ---- batch tile: as large as VMEM allows, with minimal padding --------
    per_row = 2 * (TK if n_k > 1 else H) * obs_bytes + H * 4 + H * 2 + 64
    tb_cap = max(8, (budget - weight_bytes - (4 << 20)) // per_row)
    tb_cap = max(8, min(max_batch_tile, (tb_cap // 8) * 8))
    n_b = _cdiv(B, tb_cap)
    TB = _round_up(_cdiv(B, n_b), 8)
    B_pad = _round_up(B, TB)
    if B_pad != B:
        obs = jnp.pad(obs, ((0, B_pad - B), (0, 0)))
    n_b = B_pad // TB

    # ---- VMEM limit from the actual buffer plan ----------------------------
    plan = (weight_bytes
            + 2 * TB * (TK if n_k > 1 else H) * obs_bytes   # obs, double-buffered
            + TB * H * 4                                    # f32 hidden / accumulator
            + TB * H * 2                                    # bf16 x copy (worst case)
            + 2 * 8 * TB * 4)                               # (1, TB) out rows
    vmem_limit = int(min(max(plan + plan // 4 + (8 << 20), 32 << 20), budget))

    w1_passes = 1 if n_k == 1 else n_b
    cost = pl.CostEstimate(
        flops=2 * B_pad * H * H + 3 * B_pad * H,
        transcendentals=B_pad * H,
        bytes_accessed=(B_pad * H * obs_bytes + w1_passes * H * H * w1_bytes
                        + 2 * H * 4 + B_pad * 4),
    )

    if n_k == 1:
        grid = (n_b,)
        in_specs = [
            pl.BlockSpec((TB, H), lambda i: (i, 0)),                     # obs stream
            pl.BlockSpec((H, H), lambda i: (0, 0),
                         pipeline_mode=pl.Buffered(1)),                  # W1 resident
            pl.BlockSpec((1, H), lambda i: (0, 0),
                         pipeline_mode=pl.Buffered(1)),                  # b1 row
            pl.BlockSpec((1, H), lambda i: (0, 0),
                         pipeline_mode=pl.Buffered(1)),                  # w2 row
            pl.BlockSpec(memory_space=pltpu.MemorySpace.SMEM),           # b2 scalar
        ]
        out_specs = pl.BlockSpec((1, TB), lambda i: (i, 0))
        kernel = _critic_head_resident_kernel
        scratch = []
        dims = ("parallel",)
    else:
        grid = (n_b, n_k)
        in_specs = [
            pl.BlockSpec((TB, TK), lambda i, k: (i, k)),                 # obs stream
            pl.BlockSpec((TK, H), lambda i, k: (k, 0)),                  # W1 slabs
            pl.BlockSpec((1, H), lambda i, k: (0, 0),
                         pipeline_mode=pl.Buffered(1)),                  # b1 row
            pl.BlockSpec((1, H), lambda i, k: (0, 0),
                         pipeline_mode=pl.Buffered(1)),                  # w2 row
            pl.BlockSpec(memory_space=pltpu.MemorySpace.SMEM),           # b2 scalar
        ]
        out_specs = pl.BlockSpec((1, TB), lambda i, k: (i, 0))
        kernel = _critic_head_ktiled_kernel
        scratch = [pltpu.VMEM((TB, H), jnp.float32)]
        dims = ("parallel", "arbitrary")

    v_rows = pl.pallas_call(
        kernel,
        out_shape=jax.ShapeDtypeStruct((n_b, TB), jnp.float32),
        grid_spec=pltpu.PrefetchScalarGridSpec(
            num_scalar_prefetch=0,
            grid=grid,
            in_specs=in_specs,
            out_specs=out_specs,
            scratch_shapes=scratch,
        ),
        compiler_params=pltpu.CompilerParams(
            dimension_semantics=dims,
            vmem_limit_bytes=vmem_limit,
        ),
        cost_estimate=cost,
    )(obs, w1, b1, w2, b2)

    # Lane-dense (n_b, TB) rows -> (B, 1) column; padded rows sliced off.
    return {"state_value": v_rows.reshape(B_pad, 1)[:B]}


def init_critic_params(key, hidden):
    """Deterministic synthetic critic params in kernel-native layout.

    All dtype casts / reshapes are done once here (hoisted out of the
    per-call path): w1 bf16, b1/w2 as (1, H) f32 rows, b2 (1,) f32 scalar.
    """
    k1, k2, k3, k4 = jax.random.split(key, 4)
    scale = 1.0 / jnp.sqrt(hidden)
    w1 = jax.random.uniform(k1, (hidden, hidden), jnp.float32, -scale, scale)
    b1 = jax.random.uniform(k2, (hidden,), jnp.float32, -scale, scale)
    w2 = jax.random.uniform(k3, (hidden, 1), jnp.float32, -scale, scale)
    b2 = jax.random.uniform(k4, (1,), jnp.float32, -scale, scale)
    return {
        "w1": w1.astype(jnp.bfloat16),        # one-time cast (hoisted)
        "b1": b1.reshape(1, hidden),
        "w2": w2.reshape(1, hidden),
        "b2": b2,
    }


def _reference(obs, params):
    """Pure-JAX reference matching the kernel's bf16-operand / f32-accum math."""
    x = obs.astype(jnp.bfloat16)
    h = jnp.tanh(jnp.dot(x, params["w1"], preferred_element_type=jnp.float32)
                 + params["b1"])
    return jnp.sum(h * params["w2"], axis=-1, keepdims=True) + params["b2"]


if __name__ == "__main__":
    key = jax.random.PRNGKey(0)
    k_obs, k_par, k_obs2, k_par2 = jax.random.split(key, 4)

    # ---- small demo, resident-W1 path (producer emits bf16 features) -------
    batch, hidden = 8, 32
    obs = jax.random.normal(k_obs, (batch, hidden), jnp.bfloat16)
    params = init_critic_params(k_par, hidden)

    out = critic_head_wrapper(obs, params)
    v = jax.block_until_ready(out["state_value"])
    assert v.shape == (batch, 1)
    assert jnp.allclose(v, _reference(obs, params), atol=5e-3, rtol=5e-3)

    # ---- exercise the K-tiled (streamed-W1) path at small scale ------------
    batch2, hidden2 = 16, 256
    obs2 = jax.random.normal(k_obs2, (batch2, hidden2), jnp.bfloat16)
    params2 = init_critic_params(k_par2, hidden2)

    out2 = critic_head_wrapper(obs2, params2, k_tile=128)
    v2 = jax.block_until_ready(out2["state_value"])
    assert v2.shape == (batch2, 1)
    assert jnp.allclose(v2, _reference(obs2, params2), atol=1e-2, rtol=1e-2)

    print("KERNEL_OK")
</pallas_src>

<mosaic_0001>
module attributes {stable_mosaic.version = 11 : i64} {
  func.func @_critic_head_resident_kernel(%arg0: i32, %arg1: memref<8x32xbf16, #tpu.memory_space<vmem>>, %arg2: memref<32x32xbf16, #tpu.memory_space<vmem>>, %arg3: memref<1x32xf32, #tpu.memory_space<vmem>>, %arg4: memref<1x32xf32, #tpu.memory_space<vmem>>, %arg5: memref<1xf32, #tpu.memory_space<smem>>, %arg6: memref<1x8xf32, #tpu.memory_space<vmem>>) attributes {dimension_semantics = [#tpu.dimension_semantics<parallel>], iteration_bounds = array<i64: 1>, scalar_prefetch = 0 : i64, scratch_operands = 0 : i64, tpu.core_type = #tpu.core_type<tc>, window_params = [{transform_indices = @transform_0, window_bounds = array<i64: 8, 32>}, {pipeline_mode = #tpu.pipeline_mode<synchronous>, transform_indices = @transform_1, window_bounds = array<i64: 32, 32>}, {pipeline_mode = #tpu.pipeline_mode<synchronous>, transform_indices = @transform_2, window_bounds = array<i64: 1, 32>}, {pipeline_mode = #tpu.pipeline_mode<synchronous>, transform_indices = @transform_3, window_bounds = array<i64: 1, 32>}, {transform_indices = @transform_4, window_bounds = array<i64: 1>}, {transform_indices = @transform_5, window_bounds = array<i64: 1, 8>}]} {
    %c0 = arith.constant 0 : index
    %c0_0 = arith.constant 0 : index
    %0 = vector.load %arg1[%c0, %c0_0] : memref<8x32xbf16, #tpu.memory_space<vmem>>, vector<8x32xbf16>
    %c0_1 = arith.constant 0 : index
    %c0_2 = arith.constant 0 : index
    %1 = vector.load %arg2[%c0_1, %c0_2] : memref<32x32xbf16, #tpu.memory_space<vmem>>, vector<32x32xbf16>
    %cst = arith.constant dense<0.000000e+00> : vector<8x32xf32>
    %2 = tpu.matmul %0, %1, %cst {dimension_numbers = #tpu.dot_dimension_numbers<[1], [0], [0], [1], [0, 0, 1, 1], [], []>} : vector<8x32xbf16>, vector<32x32xbf16>, vector<8x32xf32> -> vector<8x32xf32>
    %c0_3 = arith.constant 0 : index
    %c0_4 = arith.constant 0 : index
    %3 = vector.load %arg3[%c0_3, %c0_4] : memref<1x32xf32, #tpu.memory_space<vmem>>, vector<1x32xf32>
    %4 = vector.broadcast %3 : vector<1x32xf32> to vector<8x32xf32>
    %5 = arith.addf %2, %4 : vector<8x32xf32>
    %6 = math.tanh %5 : vector<8x32xf32>
    %c0_5 = arith.constant 0 : index
    %c0_6 = arith.constant 0 : index
    %7 = vector.load %arg4[%c0_5, %c0_6] : memref<1x32xf32, #tpu.memory_space<vmem>>, vector<1x32xf32>
    %8 = vector.broadcast %7 : vector<1x32xf32> to vector<8x32xf32>
    %9 = arith.mulf %6, %8 : vector<8x32xf32>
    %cst_7 = arith.constant dense<0.000000e+00> : vector<8xf32>
    %10 = vector.multi_reduction <add>, %9, %cst_7 [1] : vector<8x32xf32> to vector<8xf32>
    %11 = vector.shape_cast %10 : vector<8xf32> to vector<1x8xf32>
    %c0_8 = arith.constant 0 : index
    %12 = memref.load %arg5[%c0_8] : memref<1xf32, #tpu.memory_space<smem>>
    %13 = vector.broadcast %12 : f32 to vector<1x8xf32>
    %14 = arith.addf %11, %13 : vector<1x8xf32>
    %c0_9 = arith.constant 0 : index
    %c0_10 = arith.constant 0 : index
    %15 = vector.load %arg6[%c0_9, %c0_10] : memref<1x8xf32, #tpu.memory_space<vmem>>, vector<1x8xf32>
    tpu.vector_store %arg6[%c0_9, %c0_10], %14 {strides = array<i32>} : memref<1x8xf32, #tpu.memory_space<vmem>>, vector<1x8xf32>,
    return
  }
  func.func @transform_0(%arg0: i32) -> (i32, i32) {
    %c0_i32 = arith.constant 0 : i32
    %c0_i32_0 = arith.constant 0 : i32
    return %arg0, %c0_i32 : i32, i32
  }
  func.func @transform_1(%arg0: i32) -> (i32, i32) {
    %c0_i32 = arith.constant 0 : i32
    %c0_i32_0 = arith.constant 0 : i32
    %c0_i32_1 = arith.constant 0 : i32
    return %c0_i32, %c0_i32_0 : i32, i32
  }
  func.func @transform_2(%arg0: i32) -> (i32, i32) {
    %c0_i32 = arith.constant 0 : i32
    %c0_i32_0 = arith.constant 0 : i32
    %c0_i32_1 = arith.constant 0 : i32
    return %c0_i32, %c0_i32_0 : i32, i32
  }
  func.func @transform_3(%arg0: i32) -> (i32, i32) {
    %c0_i32 = arith.constant 0 : i32
    %c0_i32_0 = arith.constant 0 : i32
    %c0_i32_1 = arith.constant 0 : i32
    return %c0_i32, %c0_i32_0 : i32, i32
  }
  func.func @transform_4(%arg0: i32) -> i32 {
    %c0_i32 = arith.constant 0 : i32
    %c0_i32_0 = arith.constant 0 : i32
    return %c0_i32 : i32
  }
  func.func @transform_5(%arg0: i32) -> (i32, i32) {
    %c0_i32 = arith.constant 0 : i32
    %c0_i32_0 = arith.constant 0 : i32
    return %arg0, %c0_i32 : i32, i32
  }
}

</mosaic_0001>

<llo_original>
// kernel: tpu_custom_call.1
$region0: #{tpu_custom_call.1}
  #allocation0 [shape = 'u32[]', space=smem, size = 0x4, offset = 0x4, fixed_abs, tag = 'smem constant byte address 0x4 - core index']
  #allocation1 [shape = 'u32[144,128]{1,0:T(1,128)}', space=vmem, size = 0x12000, scoped, tag = 'internal scratch']
  #allocation2 [shape = 'f32[1]{0:T(128)S(6)}', space=smem, size = 0x200, scoped, tag = 'scoped memory for tpu_custom_call.1']
  %s0 = inlined_call_operand.hbm [shape: bf16[8,32], index: 0, kind: input, shape index: {}]
  %s1 = inlined_call_operand.hbm [shape: bf16[32,32], index: 1, kind: input, shape index: {}]
  %s2 = inlined_call_operand.vmem [shape: f32[1,32], index: 2, kind: input, shape index: {}]
  %s3 = inlined_call_operand.vmem [shape: f32[1,32], index: 3, kind: input, shape index: {}]
  %s4 = inlined_call_operand.<no memory space> [shape: f32[1], index: 4, kind: input, shape index: {}]
  %s5 = inlined_call_operand.hbm [shape: f32[1,8], index: 5, kind: output, shape index: {}]
  %s6 = sld [smem:[#allocation0]]
  $region38: #{tpu_custom_call.1} parent=0
    _
  %s8 = ssub.s32 1, %s6
  %s9 = scalar_select 0, %s8, %s6
  %10 = sst [smem:[#allocation2]] %s4
  $region1: #{tpu_custom_call.1} parent=0
    #allocation3 [shape = 'u8[2048]{0}', space=vmem, size = 0x800, scoped, tag = 'input window, operand 0, single buffered']
    #allocation4 [shape = 's32[1]{0}', space=sflag, size = 0x4, scoped, tag = 'scoped memory for tpu_custom_call.1']
    #allocation5 [shape = 's32[1]{0}', space=sflag, size = 0x4, scoped, tag = 'scoped memory for tpu_custom_call.1']
    #allocation6 [shape = 'u8[8192]{0}', space=vmem, size = 0x2000, scoped, tag = 'input window, operand 1, single buffered']
    #allocation7 [shape = 's32[1]{0}', space=sflag, size = 0x4, scoped, tag = 'scoped memory for tpu_custom_call.1']
    #allocation8 [shape = 'u8[512]{0}', space=vmem, size = 0x400, scoped, tag = 'output window, operand 0, single buffered']
    %11 = vsyncpa [#allocation4], 0
    %12 = vsyncpa [#allocation7], 0
    %13 = vsyncpa [#allocation5], 0
    // Predicated region
    $region2: #{tpu_custom_call.1} parent=1 // pred_check
      _
    $region3: #{tpu_custom_call.1} parent=1 // pred_check_branch
      %15 = sbr.rel (0) target = $region5
    $region4: #{tpu_custom_call.1} parent=1 // pred_region
      %s17 = ssub.s32 64, 64
      %18 = vsyncadd [#allocation4], %s17
      %s20 = sshll.u32 [#allocation3], 4
      %s21 = int_to_ptr.vmem [resolvable:$true] %s20
      %23 = dma.hbm_to_vmem [thread:$0]  %s0, 64, %s21, [#allocation4]
    $region5: #{tpu_custom_call.1} parent=1 // pred_fallthru
      _
    // Predicated region
    $region6: #{tpu_custom_call.1} parent=1 // pred_check
      _
    $region7: #{tpu_custom_call.1} parent=1 // pred_check_branch
      %25 = sbr.rel (0) target = $region9
    $region8: #{tpu_custom_call.1} parent=1 // pred_region
      %s27 = ssub.s32 256, 256
      %28 = vsyncadd [#allocation7], %s27
      %s29 = sshll.u32 [#allocation6], 4
      %s30 = int_to_ptr.vmem [resolvable:$true] %s29
      %35 = dma.hbm_to_vmem [thread:$0]  %s1, 256, %s30, [#allocation7], 64, 64, 4
    $region9: #{tpu_custom_call.1} parent=1 // pred_fallthru
      _
    // Predicated region
    $region10: #{tpu_custom_call.1} parent=1 // pred_check
      _
    $region11: #{tpu_custom_call.1} parent=1 // pred_check_branch
      %37 = sbr.rel (0) target = $region13
    $region12: #{tpu_custom_call.1} parent=1 // pred_region
      _
    $region13: #{tpu_custom_call.1} parent=1 // pred_fallthru
      _
    // Predicated region
    $region14: #{tpu_custom_call.1} parent=1 // pred_check
      _
    $region15: #{tpu_custom_call.1} parent=1 // pred_check_branch
      %39 = sbr.rel (0) target = $region17
    $region16: #{tpu_custom_call.1} parent=1 // pred_region
      _
    $region17: #{tpu_custom_call.1} parent=1 // pred_fallthru
      _
    // Predicated region
    $region18: #{tpu_custom_call.1} parent=1 // pred_check
      _
    $region19: #{tpu_custom_call.1} parent=1 // pred_check_branch
      %41 = sbr.rel (0) target = $region21
    $region20: #{tpu_custom_call.1} parent=1 // pred_region
      _
    $region21: #{tpu_custom_call.1} parent=1 // pred_fallthru
      _
    // Predicated region
    $region22: #{tpu_custom_call.1} parent=1 // pred_check
      _
    $region23: #{tpu_custom_call.1} parent=1 // pred_check_branch
      %43 = sbr.rel (0) target = $region25
    $region24: #{tpu_custom_call.1} parent=1 // pred_region
      %44 = dma.done [#allocation4], 64
    $region25: #{tpu_custom_call.1} parent=1 // pred_fallthru
      _
    // Predicated region
    $region26: #{tpu_custom_call.1} parent=1 // pred_check
      _
    $region27: #{tpu_custom_call.1} parent=1 // pred_check_branch
      %46 = sbr.rel (0) target = $region29
    $region28: #{tpu_custom_call.1} parent=1 // pred_region
      %47 = dma.done [#allocation7], 256
    $region29: #{tpu_custom_call.1} parent=1 // pred_fallthru
      _
    %v49 = vld [vmem:[#allocation3] sm:$0xf]
    %v50 = vld [vmem:[#allocation6] sm:$0xf]
    %v51 = vld [vmem:[#allocation6 + $0x4] sm:$0xf]
    %v52 = vld [vmem:[#allocation6 + $0x8] sm:$0xf]
    %v53 = vld [vmem:[#allocation6 + $0xc] sm:$0xf]
    %v54 = vld [vmem:[%s2] sm:$0x1]
    %v56 = vlaneseq
    %v57 = vshrl.u32 %v56, 7
    %v58 = vsub.s32 0, %v57
    %v59 = vrot.slane %v54, %v58
    %v65 = vunpack.c.l.b16 %v50
    %v66 = vunpack.c.l.b16 %v51
    %v67 = vunpack.c.l.b16 %v52
    %v68 = vunpack.c.l.b16 %v53
    %v69 = vpack.c.b16 %v66, %v65
    %v70 = vpack.c.b16 %v68, %v67
    %vm73 = vcmask 261120
    %v75 = vsel %vm73, %v49, 0
    %77 = vmatprep.subr.bf16.mxu0 0
    %78 = vmatpush1.bf16.msra.mxu0 0
    %79 = vmatprep.subr.bf16.mxu0 0
    %80 = vmatpush1.bf16.msra.mxu0 0
    %81 = vmatprep.subr.bf16.mxu0 0
    %82 = vmatpush1.bf16.msra.mxu0 0
    %83 = vmatprep.subr.bf16.mxu0 0
    %84 = vmatpush1.bf16.msra.mxu0 0
    %85 = vmatprep.subr.bf16.mxu0 0
    %86 = vmatpush1.bf16.msra.mxu0 0
    %87 = vmatprep.subr.bf16.mxu0 0
    %88 = vmatpush1.bf16.msra.mxu0 0
    %89 = vmatprep.subr.bf16.mxu0 0
    %90 = vmatpush1.bf16.msra.mxu0 %v70
    %91 = vmatprep.subr.bf16.mxu0 0
    %92 = vmatpush1.bf16.msra.mxu0 %v69
    %93 = vmatprep.subr.bf16.mxu0 0
    %94 = vmatpush2.bf16.msra.mxu0 0
    %95 = vmatprep.subr.bf16.mxu0 0
    %96 = vmatpush2.bf16.msra.mxu0 0
    %97 = vmatprep.subr.bf16.mxu0 0
    %98 = vmatpush2.bf16.msra.mxu0 0
    %99 = vmatprep.subr.bf16.mxu0 0
    %100 = vmatpush2.bf16.msra.mxu0 0
    %101 = vmatprep.subr.bf16.mxu0 0
    %102 = vmatpush2.bf16.msra.mxu0 0
    %103 = vmatprep.subr.bf16.mxu0 0
    %104 = vmatpush2.bf16.msra.mxu0 0
    %105 = vmatprep.subr.bf16.mxu0 0
    %106 = vmatpush2.bf16.msra.mxu0 0
    %107 = vmatprep.subr.bf16.mxu0 0
    %108 = vmatpush2.bf16.msra.mxu0 0
    %109 = vmatprep.mubr.bf16.mxu0 0
    %110 = vmatmul.mubr.bf16.gmra.mxu0 %v75
    %v111 = vpop.f32.mrf.mxu0
    %v112 = vadd.f32 %v59, %v111
    %v113 = vpop.f32.mrf.mxu0
    %v114 = vpop.f32.mrf.mxu0
    %v115 = vpop.f32.mrf.mxu0
    %116 = vdwg.mxu0
    %v117 = vtanh.pop %v112
    %v118 = vld [vmem:[%s3] sm:$0x1]
    %v120 = vlaneseq
    %v121 = vshrl.u32 %v120, 7
    %v122 = vsub.s32 0, %v121
    %v123 = vrot.slane %v118, %v122
    %v125 = vmul.f32 %v117, %v123
    %v126 = vsel %vm73, %v125, 0.0
    %127 = vadd.xlane.f32.xlu0 %v126
    %v128 = vpop.xlane.xlu0 %127
    %s129 = sld [smem:[#allocation2]]
    %v130 = vstv %s129
    %v131 = vadd.f32 %v128, %v130
    %v133 = vlaneseq
    %v134 = vand.u32 %v133, 127
    %v135 = vlaneseq
    %v136 = vshrl.u32 %v135, 7
    %v137 = vsub.s32 %v134, %v136
    %v138 = vrot.slane %v131, %v137
    %vm140 = vcmask 57344
    %141 = vst.msk [vmem:[#allocation8] sm:$0x1] %vm140, %v138
    // Predicated region
    $region30: #{tpu_custom_call.1} parent=1 // pred_check
      _
    $region31: #{tpu_custom_call.1} parent=1 // pred_check_branch
      %143 = sbr.rel (0) target = $region33
    $region32: #{tpu_custom_call.1} parent=1 // pred_region
      %s145 = ssub.s32 16, 16
      %146 = vsyncadd [#allocation5], %s145
      %s148 = sshll.u32 [#allocation8], 4
      %s149 = int_to_ptr.vmem [resolvable:$true] %s148
      %151 = dma.vmem_to_hbm [thread:$0]  %s149, 16, %s5, [#allocation5]
    $region33: #{tpu_custom_call.1} parent=1 // pred_fallthru
      _
    // Predicated region
    $region34: #{tpu_custom_call.1} parent=1 // pred_check
      _
    $region35: #{tpu_custom_call.1} parent=1 // pred_check_branch
      %153 = sbr.rel (0) target = $region37
    $region36: #{tpu_custom_call.1} parent=1 // pred_region
      %154 = dma.done [#allocation5], 16
    $region37: #{tpu_custom_call.1} parent=1 // pred_fallthru
      _
    %155 = vsyncpa [#allocation4], 1
    %156 = vsyncpa [#allocation7], 1
    %157 = vsyncpa [#allocation5], 1

</llo_original>
